<compile_context>
chip_gen: v5e
topology: v5e:2x2
jax: 0.10.0
libtpu: 0.0.40
codegen_flags: <defaults>
</compile_context>

<pallas_src>
import functools

import jax
import jax.numpy as jnp
from jax import lax
from jax.experimental import pallas as pl
from jax.experimental.pallas import tpu as pltpu


def _round_up(x, m):
    return ((x + m - 1) // m) * m


def _edge_decoder_kernel(x_t_ref, w1_ref, b1_ref, w2_ref, b2_ref, out_ref, *,
                         lane_chunk):
    """One grid step: lin2(relu(lin1(x))) over a (2H, tile_e) activation slab."""
    w1 = w1_ref[...]          # (H, 2H)  MXU LHS, resident across the grid
    b1 = b1_ref[...]          # (H, 1)   f32
    w2 = w2_ref[...]          # (H, 1)   f32
    b2 = b2_ref[...]          # (1, 1)   f32
    n_chunks = out_ref.shape[-1] // lane_chunk

    def body(c, carry):
        off = pl.multiple_of(c * lane_chunk, lane_chunk)
        x_c = x_t_ref[:, pl.ds(off, lane_chunk)]                    # (2H, chunk)
        # lin1 fused over the concatenated features: (H,2H) @ (2H,chunk) on MXU.
        h = jnp.dot(w1, x_c, preferred_element_type=jnp.float32)    # (H, chunk) f32
        h = jnp.maximum(h + b1, 0.0)                                # bias + ReLU (VPU)
        # lin2 (output width 1): per-lane multiply + cross-sublane reduce
        # (VPU + XLU) instead of an MXU matmul with a single result column.
        o = jnp.sum(h * w2, axis=0, keepdims=True) + b2             # (1, chunk) f32
        out_ref[:, :, pl.ds(off, lane_chunk)] = (
            o.reshape(1, 1, lane_chunk).astype(out_ref.dtype))
        return carry

    # Short unrolled loop over lane chunks: keeps the large DMA tile (good for
    # HBM) while bounding the live range of the f32 intermediate (no spills).
    lax.fori_loop(0, n_chunks, body, 0, unroll=True)


def edge_decoder_forward(z_author, edge_label_index, params, *,
                         tile_e=8192, lane_chunk=512, use_bf16_matmul=True):
    """z_author: (N, H) float32; edge_label_index: (2, E) int32."""
    w1, b1, w2, b2 = params           # torch layouts: (H,2H), (H,), (1,H), (1,)
    N, H = z_author.shape
    row, col = edge_label_index[0], edge_label_index[1]
    E = row.shape[0]

    assert lane_chunk % 128 == 0, "lane_chunk must be lane-aligned"
    mm_dtype = jnp.bfloat16 if use_bf16_matmul else jnp.float32
    in_itemsize = jnp.dtype(mm_dtype).itemsize

    # --- tile sizing: lane-aligned, amortizes step overhead, VMEM-aware -------
    # Cap at ~E/2 (lane-chunk aligned) so small E doesn't pad to one giant tile
    # and larger E still gives >=2 grid steps for v7x's two TensorCores.
    tile_cap = max(lane_chunk, _round_up(pl.cdiv(E, 2), lane_chunk))
    # Keep the double-buffered activation stream within a budget that is safe
    # even under v5e's 16 MiB default scoped VMEM / v7x's 64 MiB physical VMEM.
    vmem_in_budget = 8 * 1024 * 1024
    vmem_tile_cap = max(
        lane_chunk,
        (vmem_in_budget // (2 * (2 * H) * in_itemsize)) // lane_chunk * lane_chunk)
    tile_e_eff = max(lane_chunk,
                     min(_round_up(tile_e, lane_chunk), tile_cap, vmem_tile_cap))

    num_tiles = pl.cdiv(E, tile_e_eff)
    e_pad = num_tiles * tile_e_eff

    # --- build the (2H, E_pad) slab DIRECTLY in transposed matmul-dtype layout:
    # cast+transpose the tiny (N,H) array once, gather on the lane axis, concat
    # along sublanes.  Single gather pass; no full-buffer HBM transpose.
    z_t = z_author.astype(mm_dtype).T                                  # (H, N)
    x_t = jnp.concatenate([jnp.take(z_t, row, axis=1),
                           jnp.take(z_t, col, axis=1)], axis=0)        # (2H, E)
    if e_pad != E:
        x_t = jnp.pad(x_t, ((0, 0), (0, e_pad - E)))
    # TODO(synk): fuse this gather into the kernel (scalar-prefetch row/col with
    # PrefetchScalarGridSpec and gather from a VMEM-resident z_t) to drop the
    # kernel's HBM read to ~8 B/edge of indices when N*H fits VMEM.

    w1_k = w1.astype(mm_dtype)                     # (H, 2H)  MXU LHS, K = 2H
    b1_k = b1.reshape(H, 1).astype(jnp.float32)    # (H, 1)
    w2_k = w2.reshape(H, 1).astype(jnp.float32)    # (H, 1)
    b2_k = b2.reshape(1, 1).astype(jnp.float32)    # (1, 1)

    # Explicit VMEM limit with headroom (double-buffered slab + out + weights).
    vmem_need = (2 * (2 * H) * tile_e_eff * in_itemsize
                 + 2 * tile_e_eff * 4
                 + (2 * H * H) * in_itemsize + (2 * H + 2) * 4)
    vmem_limit = int(min(max(2 * vmem_need, 16 * 1024 * 1024), 48 * 1024 * 1024))

    flops = 2 * e_pad * (2 * H) * H + 3 * e_pad * H
    bytes_accessed = int(x_t.size * in_itemsize
                         + w1_k.size * in_itemsize + (2 * H + 1) * 4
                         + e_pad * 4)

    kernel = functools.partial(_edge_decoder_kernel, lane_chunk=lane_chunk)

    out = pl.pallas_call(
        kernel,
        out_shape=jax.ShapeDtypeStruct((num_tiles, 1, tile_e_eff), jnp.float32),
        grid_spec=pltpu.PrefetchScalarGridSpec(
            num_scalar_prefetch=0,
            grid=(num_tiles,),
            in_specs=[
                pl.BlockSpec((2 * H, tile_e_eff), lambda i: (0, i)),  # activations (transposed)
                pl.BlockSpec((H, 2 * H), lambda i: (0, 0)),           # W1 (resident)
                pl.BlockSpec((H, 1), lambda i: (0, 0)),               # b1 column
                pl.BlockSpec((H, 1), lambda i: (0, 0)),               # W2 column
                pl.BlockSpec((1, 1), lambda i: (0, 0)),               # b2
            ],
            out_specs=pl.BlockSpec((1, 1, tile_e_eff), lambda i: (i, 0, 0)),
        ),
        compiler_params=pltpu.CompilerParams(
            dimension_semantics=("parallel",),
            vmem_limit_bytes=vmem_limit),
        cost_estimate=pl.CostEstimate(flops=flops, transcendentals=0,
                                      bytes_accessed=bytes_accessed),
    )(x_t, w1_k, b1_k, w2_k, b2_k)

    return out.reshape(-1)[:E]   # matches torch's z.view(-1)


def init_params(key, hidden_channels):
    """torch.nn.Linear-shaped params: lin1 (H, 2H)+(H,); lin2 (1, H)+(1,)."""
    H = hidden_channels
    k1, k2, k3, k4 = jax.random.split(key, 4)
    w1 = jax.random.normal(k1, (H, 2 * H), jnp.float32) * 0.1
    b1 = jax.random.normal(k2, (H,), jnp.float32) * 0.1
    w2 = jax.random.normal(k3, (1, H), jnp.float32) * 0.1
    b2 = jax.random.normal(k4, (1,), jnp.float32) * 0.1
    return (w1, b1, w2, b2)


def reference_forward(z_author, edge_label_index, params):
    w1, b1, w2, b2 = params
    row, col = edge_label_index[0], edge_label_index[1]
    z = jnp.concatenate([z_author[row], z_author[col]], axis=-1)
    z = jnp.maximum(z @ w1.T + b1, 0.0)
    z = z @ w2.T + b2
    return z.reshape(-1)


if __name__ == "__main__":
    key = jax.random.PRNGKey(0)
    H = 32          # hidden_channels
    N = 10          # number of 'author' nodes
    E = 16          # number of edges (exercises padding of the tail tile)

    kz, ke, kp = jax.random.split(key, 3)
    z_author = jax.random.normal(kz, (N, H), jnp.float32)
    edge_label_index = jax.random.randint(ke, (2, E), 0, N, dtype=jnp.int32)
    params = init_params(kp, H)

    ref = reference_forward(z_author, edge_label_index, params)

    # f32 matmul path: tight check.
    out_f32 = jax.block_until_ready(
        edge_decoder_forward(z_author, edge_label_index, params,
                             use_bf16_matmul=False))
    assert out_f32.shape == (E,)
    assert jnp.allclose(out_f32, ref, atol=1e-5, rtol=1e-5)

    # bf16 MXU-operand path (f32 accumulation): loose tolerance.
    out_bf16 = jax.block_until_ready(
        edge_decoder_forward(z_author, edge_label_index, params,
                             use_bf16_matmul=True))
    assert out_bf16.shape == (E,)
    assert jnp.allclose(out_bf16, ref, atol=5e-2, rtol=5e-2)

    # Multi-tile grid + padded tail + multi-chunk inner loop.
    N2, E2 = 64, 1500
    kz2, ke2 = jax.random.split(jax.random.PRNGKey(1), 2)
    z2 = jax.random.normal(kz2, (N2, H), jnp.float32)
    eidx2 = jax.random.randint(ke2, (2, E2), 0, N2, dtype=jnp.int32)
    ref2 = reference_forward(z2, eidx2, params)
    out2 = jax.block_until_ready(
        edge_decoder_forward(z2, eidx2, params, tile_e=1024,
                             use_bf16_matmul=False))
    assert out2.shape == (E2,)
    assert jnp.allclose(out2, ref2, atol=1e-4, rtol=1e-4)

    print("KERNEL_OK")
</pallas_src>

<mosaic_0001>
module attributes {stable_mosaic.version = 11 : i64} {
  func.func @_edge_decoder_kernel(%arg0: i32, %arg1: memref<64x512xf32, #tpu.memory_space<vmem>>, %arg2: memref<32x64xf32, #tpu.memory_space<vmem>>, %arg3: memref<32x1xf32, #tpu.memory_space<vmem>>, %arg4: memref<32x1xf32, #tpu.memory_space<vmem>>, %arg5: memref<1x1xf32, #tpu.memory_space<vmem>>, %arg6: memref<1x1x512xf32, #tpu.memory_space<vmem>>) attributes {dimension_semantics = [#tpu.dimension_semantics<parallel>], iteration_bounds = array<i64: 1>, scalar_prefetch = 0 : i64, scratch_operands = 0 : i64, tpu.core_type = #tpu.core_type<tc>, window_params = [{transform_indices = @transform_0, window_bounds = array<i64: 64, 512>}, {pipeline_mode = #tpu.pipeline_mode<synchronous>, transform_indices = @transform_1, window_bounds = array<i64: 32, 64>}, {pipeline_mode = #tpu.pipeline_mode<synchronous>, transform_indices = @transform_2, window_bounds = array<i64: 32, 1>}, {pipeline_mode = #tpu.pipeline_mode<synchronous>, transform_indices = @transform_3, window_bounds = array<i64: 32, 1>}, {pipeline_mode = #tpu.pipeline_mode<synchronous>, transform_indices = @transform_4, window_bounds = array<i64: 1, 1>}, {transform_indices = @transform_5, window_bounds = array<i64: 1, 1, 512>}]} {
    %c0 = arith.constant 0 : index
    %c0_0 = arith.constant 0 : index
    %0 = vector.load %arg2[%c0, %c0_0] : memref<32x64xf32, #tpu.memory_space<vmem>>, vector<32x64xf32>
    %c0_1 = arith.constant 0 : index
    %c0_2 = arith.constant 0 : index
    %1 = vector.load %arg3[%c0_1, %c0_2] : memref<32x1xf32, #tpu.memory_space<vmem>>, vector<32x1xf32>
    %c0_3 = arith.constant 0 : index
    %c0_4 = arith.constant 0 : index
    %2 = vector.load %arg4[%c0_3, %c0_4] : memref<32x1xf32, #tpu.memory_space<vmem>>, vector<32x1xf32>
    %c0_5 = arith.constant 0 : index
    %c0_6 = arith.constant 0 : index
    %3 = vector.load %arg5[%c0_5, %c0_6] : memref<1x1xf32, #tpu.memory_space<vmem>>, vector<1x1xf32>
    %c0_i32 = arith.constant 0 : i32
    %c512_i32 = arith.constant 512 : i32
    %4 = arith.muli %c0_i32, %c512_i32 : i32
    %5 = tpu.assume_multiple %4, 512 : i32
    %c0_7 = arith.constant 0 : index
    %6 = arith.index_cast %5 : i32 to index
    %7 = vector.load %arg1[%c0_7, %6] : memref<64x512xf32, #tpu.memory_space<vmem>>, vector<64x512xf32>
    %cst = arith.constant dense<0.000000e+00> : vector<32x512xf32>
    %8 = tpu.matmul %0, %7, %cst {dimension_numbers = #tpu.dot_dimension_numbers<[1], [0], [0], [1], [0, 0, 1, 1], [], []>} : vector<32x64xf32>, vector<64x512xf32>, vector<32x512xf32> -> vector<32x512xf32>
    %9 = vector.broadcast %1 : vector<32x1xf32> to vector<32x512xf32>
    %10 = arith.addf %8, %9 : vector<32x512xf32>
    %cst_8 = arith.constant 0.000000e+00 : f32
    %11 = vector.broadcast %cst_8 : f32 to vector<32x512xf32>
    %12 = arith.maximumf %10, %11 : vector<32x512xf32>
    %13 = vector.broadcast %2 : vector<32x1xf32> to vector<32x512xf32>
    %14 = arith.mulf %12, %13 : vector<32x512xf32>
    %cst_9 = arith.constant dense<0.000000e+00> : vector<512xf32>
    %15 = vector.multi_reduction <add>, %14, %cst_9 [0] : vector<32x512xf32> to vector<512xf32>
    %16 = vector.shape_cast %15 : vector<512xf32> to vector<1x512xf32>
    %17 = vector.broadcast %3 : vector<1x1xf32> to vector<1x512xf32>
    %18 = arith.addf %16, %17 : vector<1x512xf32>
    %19 = vector.shape_cast %18 : vector<1x512xf32> to vector<1x1x512xf32>
    %c0_10 = arith.constant 0 : index
    %c0_11 = arith.constant 0 : index
    %20 = arith.index_cast %5 : i32 to index
    %21 = vector.load %arg6[%c0_10, %c0_11, %20] : memref<1x1x512xf32, #tpu.memory_space<vmem>>, vector<1x1x512xf32>
    tpu.vector_store %arg6[%c0_10, %c0_11, %20], %19 {strides = array<i32>} : memref<1x1x512xf32, #tpu.memory_space<vmem>>, vector<1x1x512xf32>,
    %c1_i32 = arith.constant 1 : i32
    return
  }
  func.func @transform_0(%arg0: i32) -> (i32, i32) {
    %c0_i32 = arith.constant 0 : i32
    %c0_i32_0 = arith.constant 0 : i32
    return %c0_i32, %arg0 : i32, i32
  }
  func.func @transform_1(%arg0: i32) -> (i32, i32) {
    %c0_i32 = arith.constant 0 : i32
    %c0_i32_0 = arith.constant 0 : i32
    %c0_i32_1 = arith.constant 0 : i32
    return %c0_i32, %c0_i32_0 : i32, i32
  }
  func.func @transform_2(%arg0: i32) -> (i32, i32) {
    %c0_i32 = arith.constant 0 : i32
    %c0_i32_0 = arith.constant 0 : i32
    %c0_i32_1 = arith.constant 0 : i32
    return %c0_i32, %c0_i32_0 : i32, i32
  }
  func.func @transform_3(%arg0: i32) -> (i32, i32) {
    %c0_i32 = arith.constant 0 : i32
    %c0_i32_0 = arith.constant 0 : i32
    %c0_i32_1 = arith.constant 0 : i32
    return %c0_i32, %c0_i32_0 : i32, i32
  }
  func.func @transform_4(%arg0: i32) -> (i32, i32) {
    %c0_i32 = arith.constant 0 : i32
    %c0_i32_0 = arith.constant 0 : i32
    %c0_i32_1 = arith.constant 0 : i32
    return %c0_i32, %c0_i32_0 : i32, i32
  }
  func.func @transform_5(%arg0: i32) -> (i32, i32, i32) {
    %c0_i32 = arith.constant 0 : i32
    %c0_i32_0 = arith.constant 0 : i32
    %c0_i32_1 = arith.constant 0 : i32
    return %arg0, %c0_i32, %c0_i32_0 : i32, i32, i32
  }
}

</mosaic_0001>

<llo_original>
// kernel: tpu_custom_call.1
$region0: #{tpu_custom_call.1}
  #allocation0 [shape = 'u32[]', space=smem, size = 0x4, offset = 0x4, fixed_abs, tag = 'smem constant byte address 0x4 - core index']
  #allocation1 [shape = 'u32[72,128]{1,0:T(1,128)}', space=vmem, size = 0x9000, scoped, tag = 'internal scratch']
  #allocation2 [shape = 'f32[1,1]{1,0:T(1,128)S(1)}', space=vmem, size = 0x200, scoped, tag = 'scoped memory for tpu_custom_call.1']
  %s0 = inlined_call_operand.hbm [shape: f32[64,512], index: 0, kind: input, shape index: {}]
  %s1 = inlined_call_operand.vmem [shape: f32[32,64], index: 1, kind: input, shape index: {}]
  %s2 = inlined_call_operand.vmem [shape: f32[32,1], index: 2, kind: input, shape index: {}]
  %s3 = inlined_call_operand.vmem [shape: f32[32,1], index: 3, kind: input, shape index: {}]
  %s4 = inlined_call_operand.<no memory space> [shape: f32[1,1], index: 4, kind: input, shape index: {}]
  %s5 = inlined_call_operand.hbm [shape: f32[1,1,512], index: 5, kind: output, shape index: {}]
  %s6 = sld [smem:[#allocation0]]
  $region34: #{tpu_custom_call.1} parent=0
    _
  %s8 = ssub.s32 1, %s6
  %s9 = scalar_select 0, %s8, %s6
  %v10 = vstv %s4
  %11 = vst [vmem:[#allocation2] sm:$0x1] %v10
  $region1: #{tpu_custom_call.1} parent=0
    #allocation3 [shape = 'u8[131072]{0}', space=vmem, size = 0x20000, scoped, tag = 'input window, operand 0, single buffered']
    #allocation4 [shape = 's32[1]{0}', space=sflag, size = 0x4, scoped, tag = 'scoped memory for tpu_custom_call.1']
    #allocation5 [shape = 's32[1]{0}', space=sflag, size = 0x4, scoped, tag = 'scoped memory for tpu_custom_call.1']
    #allocation6 [shape = 'u8[2048]{0}', space=vmem, size = 0x800, scoped, tag = 'output window, operand 0, single buffered']
    %12 = vsyncpa [#allocation4], 0
    %13 = vsyncpa [#allocation5], 0
    // Predicated region
    $region2: #{tpu_custom_call.1} parent=1 // pred_check
      _
    $region3: #{tpu_custom_call.1} parent=1 // pred_check_branch
      %15 = sbr.rel (0) target = $region5
    $region4: #{tpu_custom_call.1} parent=1 // pred_region
      %17 = vsyncadd [#allocation4], 0
      %s18 = sshll.u32 %s0, 4
      %s19 = int_to_ptr.hbm [resolvable:$true] %s18
      %s20 = sshll.u32 [#allocation3], 4
      %s21 = int_to_ptr.vmem [resolvable:$true] %s20
      %26 = dma.hbm_to_vmem [thread:$0]  %s19, 4096, %s21, [#allocation4], 512, 512, 32
    $region5: #{tpu_custom_call.1} parent=1 // pred_fallthru
      _
    // Predicated region
    $region6: #{tpu_custom_call.1} parent=1 // pred_check
      _
    $region7: #{tpu_custom_call.1} parent=1 // pred_check_branch
      %28 = sbr.rel (0) target = $region9
    $region8: #{tpu_custom_call.1} parent=1 // pred_region
      _
    $region9: #{tpu_custom_call.1} parent=1 // pred_fallthru
      _
    // Predicated region
    $region10: #{tpu_custom_call.1} parent=1 // pred_check
      _
    $region11: #{tpu_custom_call.1} parent=1 // pred_check_branch
      %30 = sbr.rel (0) target = $region13
    $region12: #{tpu_custom_call.1} parent=1 // pred_region
      _
    $region13: #{tpu_custom_call.1} parent=1 // pred_fallthru
      _
    // Predicated region
    $region14: #{tpu_custom_call.1} parent=1 // pred_check
      _
    $region15: #{tpu_custom_call.1} parent=1 // pred_check_branch
      %32 = sbr.rel (0) target = $region17
    $region16: #{tpu_custom_call.1} parent=1 // pred_region
      _
    $region17: #{tpu_custom_call.1} parent=1 // pred_fallthru
      _
    // Predicated region
    $region18: #{tpu_custom_call.1} parent=1 // pred_check
      _
    $region19: #{tpu_custom_call.1} parent=1 // pred_check_branch
      %34 = sbr.rel (0) target = $region21
    $region20: #{tpu_custom_call.1} parent=1 // pred_region
      _
    $region21: #{tpu_custom_call.1} parent=1 // pred_fallthru
      _
    // Predicated region
    $region22: #{tpu_custom_call.1} parent=1 // pred_check
      _
    $region23: #{tpu_custom_call.1} parent=1 // pred_check_branch
      %36 = sbr.rel (0) target = $region25
    $region24: #{tpu_custom_call.1} parent=1 // pred_region
      %38 = dma.done [#allocation4], 4096
    $region25: #{tpu_custom_call.1} parent=1 // pred_fallthru
      _
    %v39 = vld [vmem:[%s1] sm:$0xff]
    %v40 = vld [vmem:[%s1 + $0x8] sm:$0xff]
    %v41 = vld [vmem:[%s1 + $0x10] sm:$0xff]
    %v42 = vld [vmem:[%s1 + $0x18] sm:$0xff]
    %v43 = vld [vmem:[%s2] sm:$0xff]
    %v44 = vld [vmem:[%s2 + $0x8] sm:$0xff]
    %v45 = vld [vmem:[%s2 + $0x10] sm:$0xff]
    %v46 = vld [vmem:[%s2 + $0x18] sm:$0xff]
    %v47 = vld [vmem:[%s3] sm:$0xff]
    %v48 = vld [vmem:[%s3 + $0x8] sm:$0xff]
    %v49 = vld [vmem:[%s3 + $0x10] sm:$0xff]
    %v50 = vld [vmem:[%s3 + $0x18] sm:$0xff]
    %v51 = vld [vmem:[#allocation2] sm:$0x1]
    %v52 = vld [vmem:[#allocation3] sm:$0xff]
    %v53 = vld [vmem:[#allocation3 + $0x8] sm:$0xff]
    %v54 = vld [vmem:[#allocation3 + $0x10] sm:$0xff]
    %v55 = vld [vmem:[#allocation3 + $0x18] sm:$0xff]
    %v56 = vld [vmem:[#allocation3 + $0x20] sm:$0xff]
    %v57 = vld [vmem:[#allocation3 + $0x28] sm:$0xff]
    %v58 = vld [vmem:[#allocation3 + $0x30] sm:$0xff]
    %v59 = vld [vmem:[#allocation3 + $0x38] sm:$0xff]
    %v60 = vld [vmem:[#allocation3 + $0x40] sm:$0xff]
    %v61 = vld [vmem:[#allocation3 + $0x48] sm:$0xff]
    %v62 = vld [vmem:[#allocation3 + $0x50] sm:$0xff]
    %v63 = vld [vmem:[#allocation3 + $0x58] sm:$0xff]
    %v64 = vld [vmem:[#allocation3 + $0x60] sm:$0xff]
    %v65 = vld [vmem:[#allocation3 + $0x68] sm:$0xff]
    %v66 = vld [vmem:[#allocation3 + $0x70] sm:$0xff]
    %v67 = vld [vmem:[#allocation3 + $0x78] sm:$0xff]
    %v68 = vld [vmem:[#allocation3 + $0x80] sm:$0xff]
    %v69 = vld [vmem:[#allocation3 + $0x88] sm:$0xff]
    %v70 = vld [vmem:[#allocation3 + $0x90] sm:$0xff]
    %v71 = vld [vmem:[#allocation3 + $0x98] sm:$0xff]
    %v72 = vld [vmem:[#allocation3 + $0xa0] sm:$0xff]
    %v73 = vld [vmem:[#allocation3 + $0xa8] sm:$0xff]
    %v74 = vld [vmem:[#allocation3 + $0xb0] sm:$0xff]
    %v75 = vld [vmem:[#allocation3 + $0xb8] sm:$0xff]
    %v76 = vld [vmem:[#allocation3 + $0xc0] sm:$0xff]
    %v77 = vld [vmem:[#allocation3 + $0xc8] sm:$0xff]
    %v78 = vld [vmem:[#allocation3 + $0xd0] sm:$0xff]
    %v79 = vld [vmem:[#allocation3 + $0xd8] sm:$0xff]
    %v80 = vld [vmem:[#allocation3 + $0xe0] sm:$0xff]
    %v81 = vld [vmem:[#allocation3 + $0xe8] sm:$0xff]
    %v82 = vld [vmem:[#allocation3 + $0xf0] sm:$0xff]
    %v83 = vld [vmem:[#allocation3 + $0xf8] sm:$0xff]
    %85 = vset.pattern.permute.xlu0 0
    %86 = vperm.xlu0 %85, %v43
    %v87 = vpop.permute.xlu0 %86
    %90 = vset.pattern.permute.xlu0 0
    %91 = vperm.xlu0 %90, %v44
    %v92 = vpop.permute.xlu0 %91
    %95 = vset.pattern.permute.xlu0 0
    %96 = vperm.xlu0 %95, %v45
    %v97 = vpop.permute.xlu0 %96
    %100 = vset.pattern.permute.xlu0 0
    %101 = vperm.xlu0 %100, %v46
    %v102 = vpop.permute.xlu0 %101
    %vm104 = vcmask 523264
    %v106 = vsel %vm104, %v39, 0
    %v109 = vsel %vm104, %v40, 0
    %v112 = vsel %vm104, %v41, 0
    %v115 = vsel %vm104, %v42, 0
    %117 = vmatpush.msra.mxu0 0.0
    %118 = vmatpush.msra.mxu0 0.0
    %119 = vmatpush.msra.mxu0 0.0
    %120 = vmatpush.msra.mxu0 0.0
    %121 = vmatpush.msra.mxu0 0.0
    %122 = vmatpush.msra.mxu0 0.0
    %123 = vmatpush.msra.mxu0 0.0
    %124 = vmatpush.msra.mxu0 0.0
    %125 = vmatpush.msra.mxu0 %v80
    %126 = vmatpush.msra.mxu0 %v76
    %127 = vmatpush.msra.mxu0 %v72
    %128 = vmatpush.msra.mxu0 %v68
    %129 = vmatpush.msra.mxu0 %v64
    %130 = vmatpush.msra.mxu0 %v60
    %131 = vmatpush.msra.mxu0 %v56
    %132 = vmatpush.msra.mxu0 %v52
    %133 = vmatmul.f32.gmra.mxu0 %v106
    %v134 = vpop.f32.mrf.mxu0
    %v135 = vadd.f32 %v87, %v134
    %136 = vmatmul.f32.gmra.mxu0 %v109
    %v137 = vpop.f32.mrf.mxu0
    %v138 = vadd.f32 %v92, %v137
    %139 = vmatmul.f32.gmra.mxu0 %v112
    %v140 = vpop.f32.mrf.mxu0
    %v141 = vadd.f32 %v97, %v140
    %142 = vmatmul.f32.gmra.mxu0 %v115
    %v143 = vpop.f32.mrf.mxu0
    %v144 = vadd.f32 %v102, %v143
    %145 = vdwg.mxu0
    %146 = vmatpush.msra.mxu0 0.0
    %147 = vmatpush.msra.mxu0 0.0
    %148 = vmatpush.msra.mxu0 0.0
    %149 = vmatpush.msra.mxu0 0.0
    %150 = vmatpush.msra.mxu0 0.0
    %151 = vmatpush.msra.mxu0 0.0
    %152 = vmatpush.msra.mxu0 0.0
    %153 = vmatpush.msra.mxu0 0.0
    %154 = vmatpush.msra.mxu0 %v81
    %155 = vmatpush.msra.mxu0 %v77
    %156 = vmatpush.msra.mxu0 %v73
    %157 = vmatpush.msra.mxu0 %v69
    %158 = vmatpush.msra.mxu0 %v65
    %159 = vmatpush.msra.mxu0 %v61
    %160 = vmatpush.msra.mxu0 %v57
    %161 = vmatpush.msra.mxu0 %v53
    %162 = vmatmul.f32.gmra.mxu0 %v106
    %v163 = vpop.f32.mrf.mxu0
    %v164 = vadd.f32 %v87, %v163
    %165 = vmatmul.f32.gmra.mxu0 %v109
    %v166 = vpop.f32.mrf.mxu0
    %v167 = vadd.f32 %v92, %v166
    %168 = vmatmul.f32.gmra.mxu0 %v112
    %v169 = vpop.f32.mrf.mxu0
    %v170 = vadd.f32 %v97, %v169
    %171 = vmatmul.f32.gmra.mxu0 %v115
    %v172 = vpop.f32.mrf.mxu0
    %v173 = vadd.f32 %v102, %v172
    %174 = vdwg.mxu0
    %175 = vmatpush.msra.mxu0 0.0
    %176 = vmatpush.msra.mxu0 0.0
    %177 = vmatpush.msra.mxu0 0.0
    %178 = vmatpush.msra.mxu0 0.0
    %179 = vmatpush.msra.mxu0 0.0
    %180 = vmatpush.msra.mxu0 0.0
    %181 = vmatpush.msra.mxu0 0.0
    %182 = vmatpush.msra.mxu0 0.0
    %183 = vmatpush.msra.mxu0 %v82
    %184 = vmatpush.msra.mxu0 %v78
    %185 = vmatpush.msra.mxu0 %v74
    %186 = vmatpush.msra.mxu0 %v70
    %187 = vmatpush.msra.mxu0 %v66
    %188 = vmatpush.msra.mxu0 %v62
    %189 = vmatpush.msra.mxu0 %v58
    %190 = vmatpush.msra.mxu0 %v54
    %191 = vmatmul.f32.gmra.mxu0 %v106
    %v192 = vpop.f32.mrf.mxu0
    %v193 = vadd.f32 %v87, %v192
    %194 = vmatmul.f32.gmra.mxu0 %v109
    %v195 = vpop.f32.mrf.mxu0
    %v196 = vadd.f32 %v92, %v195
    %197 = vmatmul.f32.gmra.mxu0 %v112
    %v198 = vpop.f32.mrf.mxu0
    %v199 = vadd.f32 %v97, %v198
    %200 = vmatmul.f32.gmra.mxu0 %v115
    %v201 = vpop.f32.mrf.mxu0
    %v202 = vadd.f32 %v102, %v201
    %203 = vdwg.mxu0
    %204 = vmatpush.msra.mxu0 0.0
    %205 = vmatpush.msra.mxu0 0.0
    %206 = vmatpush.msra.mxu0 0.0
    %207 = vmatpush.msra.mxu0 0.0
    %208 = vmatpush.msra.mxu0 0.0
    %209 = vmatpush.msra.mxu0 0.0
    %210 = vmatpush.msra.mxu0 0.0
    %211 = vmatpush.msra.mxu0 0.0
    %212 = vmatpush.msra.mxu0 %v83
    %213 = vmatpush.msra.mxu0 %v79
    %214 = vmatpush.msra.mxu0 %v75
    %215 = vmatpush.msra.mxu0 %v71
    %216 = vmatpush.msra.mxu0 %v67
    %217 = vmatpush.msra.mxu0 %v63
    %218 = vmatpush.msra.mxu0 %v59
    %219 = vmatpush.msra.mxu0 %v55
    %220 = vmatmul.f32.gmra.mxu0 %v106
    %v221 = vpop.f32.mrf.mxu0
    %v222 = vadd.f32 %v87, %v221
    %223 = vmatmul.f32.gmra.mxu0 %v109
    %v224 = vpop.f32.mrf.mxu0
    %v225 = vadd.f32 %v92, %v224
    %226 = vmatmul.f32.gmra.mxu0 %v112
    %v227 = vpop.f32.mrf.mxu0
    %v228 = vadd.f32 %v97, %v227
    %229 = vmatmul.f32.gmra.mxu0 %v115
    %v230 = vpop.f32.mrf.mxu0
    %v231 = vadd.f32 %v102, %v230
    %232 = vdwg.mxu0
    %v233 = vmax.f32 %v135, 0.0
    %v234 = vmax.f32 %v164, 0.0
    %v235 = vmax.f32 %v193, 0.0
    %v236 = vmax.f32 %v222, 0.0
    %v237 = vmax.f32 %v138, 0.0
    %v238 = vmax.f32 %v167, 0.0
    %v239 = vmax.f32 %v196, 0.0
    %v240 = vmax.f32 %v225, 0.0
    %v241 = vmax.f32 %v141, 0.0
    %v242 = vmax.f32 %v170, 0.0
    %v243 = vmax.f32 %v199, 0.0
    %v244 = vmax.f32 %v228, 0.0
    %v245 = vmax.f32 %v144, 0.0
    %v246 = vmax.f32 %v173, 0.0
    %v247 = vmax.f32 %v202, 0.0
    %v248 = vmax.f32 %v231, 0.0
    %250 = vset.pattern.permute.xlu0 0
    %251 = vperm.xlu0 %250, %v47
    %v252 = vpop.permute.xlu0 %251
    %255 = vset.pattern.permute.xlu0 0
    %256 = vperm.xlu0 %255, %v48
    %v257 = vpop.permute.xlu0 %256
    %260 = vset.pattern.permute.xlu0 0
    %261 = vperm.xlu0 %260, %v49
    %v262 = vpop.permute.xlu0 %261
    %265 = vset.pattern.permute.xlu0 0
    %266 = vperm.xlu0 %265, %v50
    %v267 = vpop.permute.xlu0 %266
    %v269 = vmul.f32 %v233, %v252
    %v270 = vmul.f32 %v234, %v252
    %v271 = vmul.f32 %v235, %v252
    %v272 = vmul.f32 %v236, %v252
    %v273 = vmul.f32 %v237, %v257
    %v274 = vmul.f32 %v238, %v257
    %v275 = vmul.f32 %v239, %v257
    %v276 = vmul.f32 %v240, %v257
    %v277 = vmul.f32 %v241, %v262
    %v278 = vmul.f32 %v242, %v262
    %v279 = vmul.f32 %v243, %v262
    %v280 = vmul.f32 %v244, %v262
    %v281 = vmul.f32 %v245, %v267
    %v282 = vmul.f32 %v246, %v267
    %v283 = vmul.f32 %v247, %v267
    %v284 = vmul.f32 %v248, %v267
    %v285 = vadd.f32 %v269, %v273
    %v286 = vadd.f32 %v285, %v277
    %v287 = vadd.f32 %v286, %v281
    %v288 = vrot.slane %v287, 4
    %v289 = vadd.f32 %v287, %v288
    %v290 = vrot.slane %v289, 2
    %v291 = vadd.f32 %v289, %v290
    %v292 = vrot.slane %v291, 1
    %v293 = vadd.f32 %v291, %v292
    %v294 = vadd.f32 %v270, %v274
    %v295 = vadd.f32 %v294, %v278
    %v296 = vadd.f32 %v295, %v282
    %v297 = vrot.slane %v296, 4
    %v298 = vadd.f32 %v296, %v297
    %v299 = vrot.slane %v298, 2
    %v300 = vadd.f32 %v298, %v299
    %v301 = vrot.slane %v300, 1
    %v302 = vadd.f32 %v300, %v301
    %v303 = vadd.f32 %v271, %v275
    %v304 = vadd.f32 %v303, %v279
    %v305 = vadd.f32 %v304, %v283
    %v306 = vrot.slane %v305, 4
    %v307 = vadd.f32 %v305, %v306
    %v308 = vrot.slane %v307, 2
    %v309 = vadd.f32 %v307, %v308
    %v310 = vrot.slane %v309, 1
    %v311 = vadd.f32 %v309, %v310
    %v312 = vadd.f32 %v272, %v276
    %v313 = vadd.f32 %v312, %v280
    %v314 = vadd.f32 %v313, %v284
    %v315 = vrot.slane %v314, 4
    %v316 = vadd.f32 %v314, %v315
    %v317 = vrot.slane %v316, 2
    %v318 = vadd.f32 %v316, %v317
    %v319 = vrot.slane %v318, 1
    %v320 = vadd.f32 %v318, %v319
    %322 = vset.pattern.permute.xlu0 0
    %323 = vperm.xlu0 %322, %v51
    %v324 = vpop.permute.xlu0 %323
    %v326 = vperm.slane %v324, 0
    %v327 = vadd.f32 %v293, %v326
    %v328 = vadd.f32 %v302, %v326
    %v329 = vadd.f32 %v311, %v326
    %v330 = vadd.f32 %v320, %v326
    %v335 = vrot.slane %v328, 7
    %v336 = vrot.slane %v329, 6
    %v337 = vrot.slane %v330, 5
    %vm338 = vcmask 1040384
    %v339 = vsel %vm338, %v327, %v335
    %vm340 = vcmask 1042434
    %v341 = vsel %vm340, %v336, %v337
    %vm342 = vcmask 1041408
    %v343 = vsel %vm342, %v339, %v341
    %v345 = vlaneseq
    %vm346 = vcmp.ge.s32.totalorder %v345, 0
    %vm347 = vcmp.lt.s32.totalorder %v345, 512
    %vm348 = vmand %vm346, %vm347
    %349 = vst.msk [vmem:[#allocation6] sm:$0xf] %vm348, %v343
    // Predicated region
    $region26: #{tpu_custom_call.1} parent=1 // pred_check
      _
    $region27: #{tpu_custom_call.1} parent=1 // pred_check_branch
      %351 = sbr.rel (0) target = $region29
    $region28: #{tpu_custom_call.1} parent=1 // pred_region
      %353 = vsyncadd [#allocation5], 0
      %s355 = sshll.u32 [#allocation6], 4
      %s356 = int_to_ptr.vmem [resolvable:$true] %s355
      %s357 = sshll.u32 %s5, 4
      %s358 = int_to_ptr.hbm [resolvable:$true] %s357
      %360 = dma.vmem_to_hbm [thread:$0]  %s356, 64, %s358, [#allocation5]
    $region29: #{tpu_custom_call.1} parent=1 // pred_fallthru
      _
    // Predicated region
    $region30: #{tpu_custom_call.1} parent=1 // pred_check
      _
    $region31: #{tpu_custom_call.1} parent=1 // pred_check_branch
      %362 = sbr.rel (0) target = $region33
    $region32: #{tpu_custom_call.1} parent=1 // pred_region
      %364 = dma.done [#allocation5], 64
    $region33: #{tpu_custom_call.1} parent=1 // pred_fallthru
      _
    %365 = vsyncpa [#allocation4], 1
    %366 = vsyncpa [#allocation5], 1

</llo_original>
